<compile_context>
chip_gen: v7x
topology: tpu7x:2x2x1
jax: 0.10.0
libtpu: 0.0.40
codegen_flags: <defaults>
</compile_context>

<pallas_src>
import math

import jax
import jax.numpy as jnp
from jax import lax
from jax.experimental import pallas as pl
from jax.experimental.pallas import tpu as pltpu

HIDDEN = 32      # config.hidden_size (small synthetic value)
SEQ_Q = 8        # question length
SEQ_C = 8        # candidate length
SEQ = SEQ_Q + SEQ_C
VOCAB = 1000     # synthetic encoder vocab
NEG_INF = -1e9


def _round_up(x, m):
    return ((x + m - 1) // m) * m


# ----------------------------------------------------------------------------
# Pallas kernel: one batch *block* (TB rows) per grid step.
#   fused QKV matmul -> CLS-query masked softmax attention ->
#   fused (output-proj @ classifier) matmul -> (1, TB) lane-dense logits
# ----------------------------------------------------------------------------
def _encode_classify_kernel(emb_ref, bias_ref, wqkv_ref, wocls_ref, out_ref):
    TB, L, _ = bias_ref.shape            # (TB, L, 1)
    H = wocls_ref.shape[1]

    x = emb_ref[...]                     # (TB*L, H) bf16
    # One lane-dense MXU matmul for Q|K|V, f32 accumulate.
    qkv = jnp.dot(x, wqkv_ref[...], preferred_element_type=jnp.float32)  # (TB*L, 3H)
    qkv = qkv.reshape(TB, L, 3 * H)      # layout-preserving split (L % 8 == 0)

    q_cls = qkv[:, 0:1, 0:H]             # (TB, 1, H) — only the CLS query is read
    k = qkv[:, :, H:2 * H]               # (TB, L, H)
    v = qkv[:, :, 2 * H:3 * H]           # (TB, L, H)

    # Per-row CLS scores: VPU broadcast-multiply + lane reduce (no batched matmul).
    scale = H ** -0.5
    s = jnp.sum(q_cls * k, axis=-1, keepdims=True) * scale + bias_ref[...]  # (TB, L, 1) f32

    # Masked softmax over the key axis (sublanes), all in f32.
    m = jnp.max(s, axis=1, keepdims=True)                 # (TB, 1, 1)
    p = jnp.exp(s - m)                                    # (TB, L, 1)
    denom = jnp.sum(p, axis=1, keepdims=True)             # (TB, 1, 1)
    attn = p * pl.reciprocal(denom, approx=True)          # (TB, L, 1)

    ctx = jnp.sum(attn * v, axis=1)                       # (TB, H) f32, CLS context

    # nn.Dropout in eval mode is identity (deterministic forward).
    # Fused output-projection + classifier: (1,H) · (TB,H) contracted on H
    # -> lane-dense (1, TB) logits straight from the MXU (no transpose, no (·,1) store).
    logit = lax.dot_general(wocls_ref[...], ctx,
                            dimension_numbers=(((1,), (1,)), ((), ())),
                            preferred_element_type=jnp.float32)           # (1, TB)
    out_ref[0] = logit


# ----------------------------------------------------------------------------
# Wrapper: embed, pad/flatten the batch, fold weights, run one pallas_call.
# ----------------------------------------------------------------------------
@jax.jit
def baseline_logits(params, input_ids, input_mask):
    N, L = input_ids.shape
    H = HIDDEN
    # Block the batch: amortize per-step overhead and feed the MXU a real M
    # (TB*L rows, always a multiple of 128 here). TB=128 keeps multiple grid
    # blocks at realistic N so v7x can shard them across its two TensorCores.
    TB = 128 if N > 128 else _round_up(max(N, 1), 8)
    N_pad = _round_up(N, TB)
    G = N_pad // TB

    emb = jnp.take(params["tok_emb"], input_ids, axis=0)            # (N, L, H) f32
    emb = jnp.pad(emb, ((0, N_pad - N), (0, 0), (0, 0)))
    emb2d = emb.reshape(N_pad * L, H).astype(jnp.bfloat16)          # bf16 matmul operands

    mask = jnp.pad(input_mask.astype(jnp.float32), ((0, N_pad - N), (0, 0)))
    mask_bias = ((1.0 - mask) * NEG_INF)[:, :, None]                # (N_pad, L, 1) f32

    # Fold weights once, outside the kernel.
    wqkv = jnp.concatenate([params["wq"], params["wk"], params["wv"]],
                           axis=1).astype(jnp.bfloat16)             # (H, 3H)
    wocls = jnp.dot(params["wo"], params["wcls"]).T                 # (1, H): Wo @ Wcls

    out = pl.pallas_call(
        _encode_classify_kernel,
        out_shape=jax.ShapeDtypeStruct((G, 1, TB), jnp.float32),
        grid_spec=pltpu.PrefetchScalarGridSpec(
            num_scalar_prefetch=0,
            grid=(G,),
            in_specs=[
                pl.BlockSpec((TB * L, H), lambda b: (b, 0)),        # embedded tokens
                pl.BlockSpec((TB, L, 1), lambda b: (b, 0, 0)),      # additive key-mask bias
                pl.BlockSpec((H, 3 * H), lambda b: (0, 0)),         # fused Wq|Wk|Wv
                pl.BlockSpec((1, H), lambda b: (0, 0)),             # fused Wo @ Wcls row
            ],
            out_specs=pl.BlockSpec((1, 1, TB), lambda b: (b, 0, 0)),
        ),
        compiler_params=pltpu.CompilerParams(dimension_semantics=("parallel",)),
    )(emb2d, mask_bias, wqkv, wocls)

    # Classifier bias added here (cheaper than a (1,1) VMEM block per grid step).
    return out.reshape(N_pad)[:N] + params["bcls"][0, 0]            # (N,)


# ----------------------------------------------------------------------------
# Glue mirroring K2G.forward (model == 'baseline'); both candidates share one call.
# ----------------------------------------------------------------------------
def k2g_forward(params, question_ids, question_mask, cand1_ids, cand1_mask,
                cand2_ids, cand2_mask, labels=None):
    B = question_ids.shape[0]
    ids = jnp.concatenate([
        jnp.concatenate([question_ids, cand1_ids], axis=1),
        jnp.concatenate([question_ids, cand2_ids], axis=1)], axis=0)     # (2B, L)
    msk = jnp.concatenate([
        jnp.concatenate([question_mask, cand1_mask], axis=1),
        jnp.concatenate([question_mask, cand2_mask], axis=1)], axis=0)   # (2B, L)
    flat = baseline_logits(params, ids, msk)                             # (2B,)
    logits = jnp.stack([flat[:B], flat[B:]], axis=1)                     # (B, 2)
    outputs = (logits,)
    if labels is not None:
        logp = jax.nn.log_softmax(logits, axis=-1)
        loss = -jnp.mean(jnp.take_along_axis(logp, labels[:, None], axis=1))
        outputs = (loss,) + outputs
    return outputs


def init_params(key):
    ks = jax.random.split(key, 7)
    s = 0.02
    return {
        "tok_emb": s * jax.random.normal(ks[0], (VOCAB, HIDDEN), jnp.float32),
        "wq": s * jax.random.normal(ks[1], (HIDDEN, HIDDEN), jnp.float32),
        "wk": s * jax.random.normal(ks[2], (HIDDEN, HIDDEN), jnp.float32),
        "wv": s * jax.random.normal(ks[3], (HIDDEN, HIDDEN), jnp.float32),
        "wo": s * jax.random.normal(ks[4], (HIDDEN, HIDDEN), jnp.float32),
        "wcls": s * jax.random.normal(ks[5], (HIDDEN, 1), jnp.float32),
        "bcls": jnp.zeros((1, 1), jnp.float32),
    }


if __name__ == "__main__":
    key = jax.random.PRNGKey(0)
    pkey, k1, k2, k3, k4 = jax.random.split(key, 5)

    params = init_params(pkey)

    B = 2
    question_ids = jax.random.randint(k1, (B, SEQ_Q), 0, VOCAB, jnp.int32)
    cand1_ids = jax.random.randint(k2, (B, SEQ_C), 0, VOCAB, jnp.int32)
    cand2_ids = jax.random.randint(k3, (B, SEQ_C), 0, VOCAB, jnp.int32)
    question_mask = jnp.ones((B, SEQ_Q), jnp.int32)
    cand1_mask = jnp.ones((B, SEQ_C), jnp.int32)
    cand2_mask = jnp.ones((B, SEQ_C), jnp.int32)
    labels = jax.random.randint(k4, (B,), 0, 2, jnp.int32)

    loss, logits = k2g_forward(params, question_ids, question_mask,
                               cand1_ids, cand1_mask, cand2_ids, cand2_mask,
                               labels=labels)
    jax.block_until_ready((loss, logits))
    assert logits.shape == (B, 2) and loss.shape == ()
    assert bool(jnp.all(jnp.isfinite(logits))) and bool(jnp.isfinite(loss))
    print("KERNEL_OK")
</pallas_src>

<mosaic_0001>
module attributes {stable_mosaic.version = 11 : i64} {
  func.func @_encode_classify_kernel(%arg0: i32, %arg1: memref<128x32xbf16, #tpu.memory_space<vmem>>, %arg2: memref<8x16x1xf32, #tpu.memory_space<vmem>>, %arg3: memref<32x96xbf16, #tpu.memory_space<vmem>>, %arg4: memref<1x32xf32, #tpu.memory_space<vmem>>, %arg5: memref<1x1x8xf32, #tpu.memory_space<vmem>>) attributes {dimension_semantics = [#tpu.dimension_semantics<parallel>], iteration_bounds = array<i64: 1>, scalar_prefetch = 0 : i64, scratch_operands = 0 : i64, tpu.core_type = #tpu.core_type<tc>, window_params = [{transform_indices = @transform_0, window_bounds = array<i64: 128, 32>}, {transform_indices = @transform_1, window_bounds = array<i64: 8, 16, 1>}, {pipeline_mode = #tpu.pipeline_mode<synchronous>, transform_indices = @transform_2, window_bounds = array<i64: 32, 96>}, {pipeline_mode = #tpu.pipeline_mode<synchronous>, transform_indices = @transform_3, window_bounds = array<i64: 1, 32>}, {transform_indices = @transform_4, window_bounds = array<i64: 1, 1, 8>}]} {
    %c0 = arith.constant 0 : index
    %c0_0 = arith.constant 0 : index
    %0 = vector.load %arg1[%c0, %c0_0] : memref<128x32xbf16, #tpu.memory_space<vmem>>, vector<128x32xbf16>
    %c0_1 = arith.constant 0 : index
    %c0_2 = arith.constant 0 : index
    %1 = vector.load %arg3[%c0_1, %c0_2] : memref<32x96xbf16, #tpu.memory_space<vmem>>, vector<32x96xbf16>
    %cst = arith.constant dense<0.000000e+00> : vector<128x96xf32>
    %2 = tpu.matmul %0, %1, %cst {dimension_numbers = #tpu.dot_dimension_numbers<[1], [0], [0], [1], [0, 0, 1, 1], [], []>} : vector<128x32xbf16>, vector<32x96xbf16>, vector<128x96xf32> -> vector<128x96xf32>
    %3 = vector.shape_cast %2 : vector<128x96xf32> to vector<8x16x96xf32>
    %4 = vector.extract_strided_slice %3 {offsets = [0, 0, 0], sizes = [8, 1, 32], strides = [1, 1, 1]} : vector<8x16x96xf32> to vector<8x1x32xf32>
    %5 = vector.extract_strided_slice %3 {offsets = [0, 0, 32], sizes = [8, 16, 32], strides = [1, 1, 1]} : vector<8x16x96xf32> to vector<8x16x32xf32>
    %6 = vector.extract_strided_slice %3 {offsets = [0, 0, 64], sizes = [8, 16, 32], strides = [1, 1, 1]} : vector<8x16x96xf32> to vector<8x16x32xf32>
    %7 = vector.broadcast %4 : vector<8x1x32xf32> to vector<8x16x32xf32>
    %8 = arith.mulf %7, %5 : vector<8x16x32xf32>
    %cst_3 = arith.constant dense<0.000000e+00> : vector<8x16xf32>
    %9 = vector.multi_reduction <add>, %8, %cst_3 [2] : vector<8x16x32xf32> to vector<8x16xf32>
    %10 = vector.shape_cast %9 : vector<8x16xf32> to vector<8x16x1xf32>
    %cst_4 = arith.constant 0.176776692 : f32
    %11 = vector.broadcast %cst_4 : f32 to vector<8x16x1xf32>
    %12 = arith.mulf %10, %11 : vector<8x16x1xf32>
    %c0_5 = arith.constant 0 : index
    %c0_6 = arith.constant 0 : index
    %c0_7 = arith.constant 0 : index
    %13 = vector.load %arg2[%c0_5, %c0_6, %c0_7] : memref<8x16x1xf32, #tpu.memory_space<vmem>>, vector<8x16x1xf32>
    %14 = arith.addf %12, %13 : vector<8x16x1xf32>
    %cst_8 = arith.constant dense<0xFF800000> : vector<8x1xf32>
    %15 = vector.multi_reduction <maximumf>, %14, %cst_8 [1] : vector<8x16x1xf32> to vector<8x1xf32>
    %16 = vector.shape_cast %15 : vector<8x1xf32> to vector<8x1x1xf32>
    %17 = vector.broadcast %16 : vector<8x1x1xf32> to vector<8x16x1xf32>
    %18 = arith.subf %14, %17 : vector<8x16x1xf32>
    %19 = math.exp %18 : vector<8x16x1xf32>
    %cst_9 = arith.constant dense<0.000000e+00> : vector<8x1xf32>
    %20 = vector.multi_reduction <add>, %19, %cst_9 [1] : vector<8x16x1xf32> to vector<8x1xf32>
    %21 = vector.shape_cast %20 : vector<8x1xf32> to vector<8x1x1xf32>
    %22 = tpu.reciprocal %21 {approx = true} : vector<8x1x1xf32> -> vector<8x1x1xf32>
    %23 = vector.broadcast %22 : vector<8x1x1xf32> to vector<8x16x1xf32>
    %24 = arith.mulf %19, %23 : vector<8x16x1xf32>
    %25 = vector.broadcast %24 : vector<8x16x1xf32> to vector<8x16x32xf32>
    %26 = arith.mulf %25, %6 : vector<8x16x32xf32>
    %cst_10 = arith.constant dense<0.000000e+00> : vector<8x32xf32>
    %27 = vector.multi_reduction <add>, %26, %cst_10 [1] : vector<8x16x32xf32> to vector<8x32xf32>
    %c0_11 = arith.constant 0 : index
    %c0_12 = arith.constant 0 : index
    %28 = vector.load %arg4[%c0_11, %c0_12] : memref<1x32xf32, #tpu.memory_space<vmem>>, vector<1x32xf32>
    %cst_13 = arith.constant dense<0.000000e+00> : vector<1x8xf32>
    %29 = tpu.matmul %28, %27, %cst_13 {dimension_numbers = #tpu.dot_dimension_numbers<[1], [1], [0], [0], [0, 0, 1, 0], [], []>} : vector<1x32xf32>, vector<8x32xf32>, vector<1x8xf32> -> vector<1x8xf32>
    %c0_14 = arith.constant 0 : index
    %c0_15 = arith.constant 0 : index
    %c0_16 = arith.constant 0 : index
    %30 = vector.load %arg5[%c0_14, %c0_15, %c0_16] : memref<1x1x8xf32, #tpu.memory_space<vmem>>, vector<1x1x8xf32>
    %31 = vector.shape_cast %30 : vector<1x1x8xf32> to vector<1x8xf32>
    %32 = vector.shape_cast %29 : vector<1x8xf32> to vector<1x1x8xf32>
    tpu.vector_store %arg5[%c0_14, %c0_15, %c0_16], %32 {strides = array<i32>} : memref<1x1x8xf32, #tpu.memory_space<vmem>>, vector<1x1x8xf32>,
    return
  }
  func.func @transform_0(%arg0: i32) -> (i32, i32) {
    %c0_i32 = arith.constant 0 : i32
    %c0_i32_0 = arith.constant 0 : i32
    return %arg0, %c0_i32 : i32, i32
  }
  func.func @transform_1(%arg0: i32) -> (i32, i32, i32) {
    %c0_i32 = arith.constant 0 : i32
    %c0_i32_0 = arith.constant 0 : i32
    %c0_i32_1 = arith.constant 0 : i32
    return %arg0, %c0_i32, %c0_i32_0 : i32, i32, i32
  }
  func.func @transform_2(%arg0: i32) -> (i32, i32) {
    %c0_i32 = arith.constant 0 : i32
    %c0_i32_0 = arith.constant 0 : i32
    %c0_i32_1 = arith.constant 0 : i32
    return %c0_i32, %c0_i32_0 : i32, i32
  }
  func.func @transform_3(%arg0: i32) -> (i32, i32) {
    %c0_i32 = arith.constant 0 : i32
    %c0_i32_0 = arith.constant 0 : i32
    %c0_i32_1 = arith.constant 0 : i32
    return %c0_i32, %c0_i32_0 : i32, i32
  }
  func.func @transform_4(%arg0: i32) -> (i32, i32, i32) {
    %c0_i32 = arith.constant 0 : i32
    %c0_i32_0 = arith.constant 0 : i32
    %c0_i32_1 = arith.constant 0 : i32
    return %arg0, %c0_i32, %c0_i32_0 : i32, i32, i32
  }
}

</mosaic_0001>

<llo_original>
// kernel: baseline_logits.1
$region0: #{baseline_logits.1}
  #allocation0 [shape = 'u32[]', space=smem, size = 0x4, offset = 0x4, fixed_abs, tag = 'smem constant byte address 0x4 - core index']
  #allocation1 [shape = 'u32[144,128]{1,0:T(1,128)}', space=vmem, size = 0x12000, scoped, tag = 'internal scratch']
  %s0 = inlined_call_operand.vmem [shape: bf16[128,32], index: 0, kind: input, shape index: {}]
  %s1 = inlined_call_operand.vmem [shape: f32[8,16,1], index: 1, kind: input, shape index: {}]
  %s2 = inlined_call_operand.vmem [shape: bf16[32,96], index: 2, kind: input, shape index: {}]
  %s3 = inlined_call_operand.vmem [shape: f32[1,32], index: 3, kind: input, shape index: {}]
  %s4 = inlined_call_operand.vmem [shape: f32[1,1,8], index: 4, kind: output, shape index: {}]
  %s5 = sld [smem:[#allocation0]]
  $region26: #{baseline_logits.1} parent=0
    _
  %s7 = ssub.s32 1, %s5
  %s8 = scalar_select 0, %s7, %s5
  // Predicated region
  $region2: #{baseline_logits.1} parent=0 // pred_check
    _
  $region3: #{baseline_logits.1} parent=0 // pred_check_branch
    %10 = sbr.rel (0) target = $region5
  $region4: #{baseline_logits.1} parent=0 // pred_region
    _
  $region5: #{baseline_logits.1} parent=0 // pred_fallthru
    _
  // Predicated region
  $region6: #{baseline_logits.1} parent=0 // pred_check
    _
  $region7: #{baseline_logits.1} parent=0 // pred_check_branch
    %12 = sbr.rel (0) target = $region9
  $region8: #{baseline_logits.1} parent=0 // pred_region
    _
  $region9: #{baseline_logits.1} parent=0 // pred_fallthru
    _
  // Predicated region
  $region10: #{baseline_logits.1} parent=0 // pred_check
    _
  $region11: #{baseline_logits.1} parent=0 // pred_check_branch
    %14 = sbr.rel (0) target = $region13
  $region12: #{baseline_logits.1} parent=0 // pred_region
    _
  $region13: #{baseline_logits.1} parent=0 // pred_fallthru
    _
  // Predicated region
  $region14: #{baseline_logits.1} parent=0 // pred_check
    _
  $region15: #{baseline_logits.1} parent=0 // pred_check_branch
    %16 = sbr.rel (0) target = $region17
  $region16: #{baseline_logits.1} parent=0 // pred_region
    _
  $region17: #{baseline_logits.1} parent=0 // pred_fallthru
    _
  %v18 = vld [vmem:[%s0] sm:$0xf]
  %v19 = vld [vmem:[%s0 + $0x4] sm:$0xf]
  %v20 = vld [vmem:[%s0 + $0x8] sm:$0xf]
  %v21 = vld [vmem:[%s0 + $0xc] sm:$0xf]
  %v22 = vld [vmem:[%s0 + $0x10] sm:$0xf]
  %v23 = vld [vmem:[%s0 + $0x14] sm:$0xf]
  %v24 = vld [vmem:[%s0 + $0x18] sm:$0xf]
  %v25 = vld [vmem:[%s0 + $0x1c] sm:$0xf]
  %v26 = vld [vmem:[%s0 + $0x20] sm:$0xf]
  %v27 = vld [vmem:[%s0 + $0x24] sm:$0xf]
  %v28 = vld [vmem:[%s0 + $0x28] sm:$0xf]
  %v29 = vld [vmem:[%s0 + $0x2c] sm:$0xf]
  %v30 = vld [vmem:[%s0 + $0x30] sm:$0xf]
  %v31 = vld [vmem:[%s0 + $0x34] sm:$0xf]
  %v32 = vld [vmem:[%s0 + $0x38] sm:$0xf]
  %v33 = vld [vmem:[%s0 + $0x3c] sm:$0xf]
  %v34 = vld [vmem:[%s2] sm:$0xf]
  %v35 = vld [vmem:[%s2 + $0x4] sm:$0xf]
  %v36 = vld [vmem:[%s2 + $0x8] sm:$0xf]
  %v37 = vld [vmem:[%s2 + $0xc] sm:$0xf]
  %v54 = vunpack.c.l.b16 %v18
  %v55 = vunpack.c.l.b16 %v19
  %v56 = vunpack.c.l.b16 %v20
  %v57 = vunpack.c.l.b16 %v21
  %v58 = vunpack.c.l.b16 %v22
  %v59 = vunpack.c.l.b16 %v23
  %v60 = vunpack.c.l.b16 %v24
  %v61 = vunpack.c.l.b16 %v25
  %v62 = vunpack.c.l.b16 %v26
  %v63 = vunpack.c.l.b16 %v27
  %v64 = vunpack.c.l.b16 %v28
  %v65 = vunpack.c.l.b16 %v29
  %v66 = vunpack.c.l.b16 %v30
  %v67 = vunpack.c.l.b16 %v31
  %v68 = vunpack.c.l.b16 %v32
  %v69 = vunpack.c.l.b16 %v33
  %v70 = vpack.c.b16 %v55, %v54
  %v71 = vpack.c.b16 %v57, %v56
  %v72 = vpack.c.b16 %v59, %v58
  %v73 = vpack.c.b16 %v61, %v60
  %v74 = vpack.c.b16 %v63, %v62
  %v75 = vpack.c.b16 %v65, %v64
  %v76 = vpack.c.b16 %v67, %v66
  %v77 = vpack.c.b16 %v69, %v68
  %v82 = vunpack.c.l.b16 %v34
  %v83 = vunpack.c.l.b16 %v35
  %v84 = vunpack.c.l.b16 %v36
  %v85 = vunpack.c.l.b16 %v37
  %v86 = vpack.c.b16 %v83, %v82
  %v87 = vpack.c.b16 %v85, %v84
  %vm90 = vcmask 261120
  %v92 = vsel %vm90, %v70, 0
  %v95 = vsel %vm90, %v71, 0
  %v98 = vsel %vm90, %v72, 0
  %v101 = vsel %vm90, %v73, 0
  %v104 = vsel %vm90, %v74, 0
  %v107 = vsel %vm90, %v75, 0
  %v110 = vsel %vm90, %v76, 0
  %v113 = vsel %vm90, %v77, 0
  %115 = vmatprep.subr.bf16.mxu0 0
  %116 = vmatpush1.bf16.msra.mxu0 %v86
  %117 = vmatprep.subr.bf16.mxu0 0
  %118 = vmatpush1.bf16.msra.mxu0 %v87
  %119 = vmatprep.subr.bf16.mxu0 0
  %120 = vmatpush1.bf16.msra.mxu0 0
  %121 = vmatprep.subr.bf16.mxu0 0
  %122 = vmatpush1.bf16.msra.mxu0 0
  %123 = vmatprep.subr.bf16.mxu0 0
  %124 = vmatpush1.bf16.msra.mxu0 0
  %125 = vmatprep.subr.bf16.mxu0 0
  %126 = vmatpush1.bf16.msra.mxu0 0
  %127 = vmatprep.subr.bf16.mxu0 0
  %128 = vmatpush1.bf16.msra.mxu0 0
  %129 = vmatprep.subr.bf16.mxu0 0
  %130 = vmatpush1.bf16.msra.mxu0 0
  %131 = vmatprep.subr.bf16.mxu0 0
  %132 = vmatpush1.bf16.msra.mxu0 0
  %133 = vmatprep.subr.bf16.mxu0 0
  %134 = vmatpush1.bf16.msra.mxu0 0
  %135 = vmatprep.subr.bf16.mxu0 0
  %136 = vmatpush1.bf16.msra.mxu0 0
  %137 = vmatprep.subr.bf16.mxu0 0
  %138 = vmatpush1.bf16.msra.mxu0 0
  %139 = vmatprep.subr.bf16.mxu0 0
  %140 = vmatpush1.bf16.msra.mxu0 0
  %141 = vmatprep.subr.bf16.mxu0 0
  %142 = vmatpush1.bf16.msra.mxu0 0
  %143 = vmatprep.subr.bf16.mxu0 0
  %144 = vmatpush1.bf16.msra.mxu0 0
  %145 = vmatprep.subr.bf16.mxu0 0
  %146 = vmatpush1.bf16.msra.mxu0 0
  %147 = vmatprep.mubr.bf16.mxu0 0
  %148 = vmatmul.mubr.bf16.gmra.mrb[0].mxu0 %v92
  %v149 = vpop.f32.mrb[0].mxu0
  %v150 = vadd.f32 0.0, %v149
  %v151 = vpop.f32.mrb[0].mxu0
  %v152 = vpop.f32.mrb[0].mxu0
  %v153 = vadd.f32 0.0, %v152
  %v154 = vpop.f32.mrb[0].mxu0
  %155 = vmatprep.mubr.bf16.mxu0 0
  %156 = vmatmul.mubr.bf16.gmra.mrb[0].mxu0 %v95
  %v157 = vpop.f32.mrb[0].mxu0
  %v158 = vadd.f32 0.0, %v157
  %v159 = vpop.f32.mrb[0].mxu0
  %v160 = vpop.f32.mrb[0].mxu0
  %v161 = vadd.f32 0.0, %v160
  %v162 = vpop.f32.mrb[0].mxu0
  %163 = vmatprep.mubr.bf16.mxu0 0
  %164 = vmatmul.mubr.bf16.gmra.mrb[0].mxu0 %v98
  %v165 = vpop.f32.mrb[0].mxu0
  %v166 = vadd.f32 0.0, %v165
  %v167 = vpop.f32.mrb[0].mxu0
  %v168 = vpop.f32.mrb[0].mxu0
  %v169 = vadd.f32 0.0, %v168
  %v170 = vpop.f32.mrb[0].mxu0
  %171 = vmatprep.mubr.bf16.mxu0 0
  %172 = vmatmul.mubr.bf16.gmra.mrb[0].mxu0 %v101
  %v173 = vpop.f32.mrb[0].mxu0
  %v174 = vadd.f32 0.0, %v173
  %v175 = vpop.f32.mrb[0].mxu0
  %v176 = vpop.f32.mrb[0].mxu0
  %v177 = vadd.f32 0.0, %v176
  %v178 = vpop.f32.mrb[0].mxu0
  %179 = vmatprep.mubr.bf16.mxu0 0
  %180 = vmatmul.mubr.bf16.gmra.mrb[0].mxu0 %v104
  %v181 = vpop.f32.mrb[0].mxu0
  %v182 = vadd.f32 0.0, %v181
  %v183 = vpop.f32.mrb[0].mxu0
  %v184 = vpop.f32.mrb[0].mxu0
  %v185 = vadd.f32 0.0, %v184
  %v186 = vpop.f32.mrb[0].mxu0
  %187 = vmatprep.mubr.bf16.mxu0 0
  %188 = vmatmul.mubr.bf16.gmra.mrb[0].mxu0 %v107
  %v189 = vpop.f32.mrb[0].mxu0
  %v190 = vadd.f32 0.0, %v189
  %v191 = vpop.f32.mrb[0].mxu0
  %v192 = vpop.f32.mrb[0].mxu0
  %v193 = vadd.f32 0.0, %v192
  %v194 = vpop.f32.mrb[0].mxu0
  %195 = vmatprep.mubr.bf16.mxu0 0
  %196 = vmatmul.mubr.bf16.gmra.mrb[0].mxu0 %v110
  %v197 = vpop.f32.mrb[0].mxu0
  %v198 = vadd.f32 0.0, %v197
  %v199 = vpop.f32.mrb[0].mxu0
  %v200 = vpop.f32.mrb[0].mxu0
  %v201 = vadd.f32 0.0, %v200
  %v202 = vpop.f32.mrb[0].mxu0
  %203 = vmatprep.mubr.bf16.mxu0 0
  %204 = vmatmul.mubr.bf16.gmra.mrb[0].mxu0 %v113
  %v205 = vpop.f32.mrb[0].mxu0
  %v206 = vadd.f32 0.0, %v205
  %v207 = vpop.f32.mrb[0].mxu0
  %v208 = vpop.f32.mrb[0].mxu0
  %v209 = vadd.f32 0.0, %v208
  %v210 = vpop.f32.mrb[0].mxu0
  %211 = vdwg.mxu0
  %v212 = vlaneseq
  %v213 = vshrl.u32 %v212, 7
  %v214 = vsub.s32 0, %v213
  %v215 = vrot.slane %v150, %v214
  %v216 = vlaneseq
  %v217 = vshrl.u32 %v216, 7
  %v218 = vsub.s32 0, %v217
  %v219 = vrot.slane %v158, %v218
  %v220 = vlaneseq
  %v221 = vshrl.u32 %v220, 7
  %v222 = vsub.s32 0, %v221
  %v223 = vrot.slane %v166, %v222
  %v224 = vlaneseq
  %v225 = vshrl.u32 %v224, 7
  %v226 = vsub.s32 0, %v225
  %v227 = vrot.slane %v174, %v226
  %v228 = vlaneseq
  %v229 = vshrl.u32 %v228, 7
  %v230 = vsub.s32 0, %v229
  %v231 = vrot.slane %v182, %v230
  %v232 = vlaneseq
  %v233 = vshrl.u32 %v232, 7
  %v234 = vsub.s32 0, %v233
  %v235 = vrot.slane %v190, %v234
  %v236 = vlaneseq
  %v237 = vshrl.u32 %v236, 7
  %v238 = vsub.s32 0, %v237
  %v239 = vrot.slane %v198, %v238
  %v240 = vlaneseq
  %v241 = vshrl.u32 %v240, 7
  %v242 = vsub.s32 0, %v241
  %v243 = vrot.slane %v206, %v242
  %260 = vrot.lane.b32.xlu0 %v150, 96
  %v261 = vpop.permute.xlu0 %260
  %262 = vrot.lane.b32.xlu0 %v153, 96
  %v263 = vpop.permute.xlu0 %262
  %264 = vrot.lane.b32.xlu0 %v158, 96
  %v265 = vpop.permute.xlu0 %264
  %266 = vrot.lane.b32.xlu0 %v161, 96
  %v267 = vpop.permute.xlu0 %266
  %268 = vrot.lane.b32.xlu0 %v166, 96
  %v269 = vpop.permute.xlu0 %268
  %270 = vrot.lane.b32.xlu0 %v169, 96
  %v271 = vpop.permute.xlu0 %270
  %272 = vrot.lane.b32.xlu0 %v174, 96
  %v273 = vpop.permute.xlu0 %272
  %274 = vrot.lane.b32.xlu0 %v177, 96
  %v275 = vpop.permute.xlu0 %274
  %276 = vrot.lane.b32.xlu0 %v182, 96
  %v277 = vpop.permute.xlu0 %276
  %278 = vrot.lane.b32.xlu0 %v185, 96
  %v279 = vpop.permute.xlu0 %278
  %280 = vrot.lane.b32.xlu0 %v190, 96
  %v281 = vpop.permute.xlu0 %280
  %282 = vrot.lane.b32.xlu0 %v193, 96
  %v283 = vpop.permute.xlu0 %282
  %284 = vrot.lane.b32.xlu0 %v198, 96
  %v285 = vpop.permute.xlu0 %284
  %286 = vrot.lane.b32.xlu0 %v201, 96
  %v287 = vpop.permute.xlu0 %286
  %288 = vrot.lane.b32.xlu0 %v206, 96
  %v289 = vpop.permute.xlu0 %288
  %290 = vrot.lane.b32.xlu0 %v209, 96
  %v291 = vpop.permute.xlu0 %290
  %v308 = vmul.f32 %v215, %v261
  %v309 = vmul.f32 %v215, %v263
  %v310 = vmul.f32 %v219, %v265
  %v311 = vmul.f32 %v219, %v267
  %v312 = vmul.f32 %v223, %v269
  %v313 = vmul.f32 %v223, %v271
  %v314 = vmul.f32 %v227, %v273
  %v315 = vmul.f32 %v227, %v275
  %v316 = vmul.f32 %v231, %v277
  %v317 = vmul.f32 %v231, %v279
  %v318 = vmul.f32 %v235, %v281
  %v319 = vmul.f32 %v235, %v283
  %v320 = vmul.f32 %v239, %v285
  %v321 = vmul.f32 %v239, %v287
  %v322 = vmul.f32 %v243, %v289
  %v323 = vmul.f32 %v243, %v291
  %v324 = vsel %vm90, %v308, 0.0
  %325 = vadd.xlane.f32.xlu0 %v324
  %v326 = vpop.xlane.xlu0 %325
  %v327 = vsel %vm90, %v309, 0.0
  %328 = vadd.xlane.f32.xlu0 %v327
  %v329 = vpop.xlane.xlu0 %328
  %v330 = vsel %vm90, %v310, 0.0
  %331 = vadd.xlane.f32.xlu0 %v330
  %v332 = vpop.xlane.xlu0 %331
  %v333 = vsel %vm90, %v311, 0.0
  %334 = vadd.xlane.f32.xlu0 %v333
  %v335 = vpop.xlane.xlu0 %334
  %v336 = vsel %vm90, %v312, 0.0
  %337 = vadd.xlane.f32.xlu0 %v336
  %v338 = vpop.xlane.xlu0 %337
  %v339 = vsel %vm90, %v313, 0.0
  %340 = vadd.xlane.f32.xlu0 %v339
  %v341 = vpop.xlane.xlu0 %340
  %v342 = vsel %vm90, %v314, 0.0
  %343 = vadd.xlane.f32.xlu0 %v342
  %v344 = vpop.xlane.xlu0 %343
  %v345 = vsel %vm90, %v315, 0.0
  %346 = vadd.xlane.f32.xlu0 %v345
  %v347 = vpop.xlane.xlu0 %346
  %v348 = vsel %vm90, %v316, 0.0
  %349 = vadd.xlane.f32.xlu0 %v348
  %v350 = vpop.xlane.xlu0 %349
  %v351 = vsel %vm90, %v317, 0.0
  %352 = vadd.xlane.f32.xlu0 %v351
  %v353 = vpop.xlane.xlu0 %352
  %v354 = vsel %vm90, %v318, 0.0
  %355 = vadd.xlane.f32.xlu0 %v354
  %v356 = vpop.xlane.xlu0 %355
  %v357 = vsel %vm90, %v319, 0.0
  %358 = vadd.xlane.f32.xlu0 %v357
  %v359 = vpop.xlane.xlu0 %358
  %v360 = vsel %vm90, %v320, 0.0
  %361 = vadd.xlane.f32.xlu0 %v360
  %v362 = vpop.xlane.xlu0 %361
  %v363 = vsel %vm90, %v321, 0.0
  %364 = vadd.xlane.f32.xlu0 %v363
  %v365 = vpop.xlane.xlu0 %364
  %v366 = vsel %vm90, %v322, 0.0
  %367 = vadd.xlane.f32.xlu0 %v366
  %v368 = vpop.xlane.xlu0 %367
  %v369 = vsel %vm90, %v323, 0.0
  %370 = vadd.xlane.f32.xlu0 %v369
  %v371 = vpop.xlane.xlu0 %370
  %v372 = vmul.f32 %v326, 0.17677669
  %v373 = vmul.f32 %v329, 0.17677669
  %v374 = vmul.f32 %v332, 0.17677669
  %v375 = vmul.f32 %v335, 0.17677669
  %v376 = vmul.f32 %v338, 0.17677669
  %v377 = vmul.f32 %v341, 0.17677669
  %v378 = vmul.f32 %v344, 0.17677669
  %v379 = vmul.f32 %v347, 0.17677669
  %v380 = vmul.f32 %v350, 0.17677669
  %v381 = vmul.f32 %v353, 0.17677669
  %v382 = vmul.f32 %v356, 0.17677669
  %v383 = vmul.f32 %v359, 0.17677669
  %v384 = vmul.f32 %v362, 0.17677669
  %v385 = vmul.f32 %v365, 0.17677669
  %v386 = vmul.f32 %v368, 0.17677669
  %v387 = vmul.f32 %v371, 0.17677669
  %v388 = vld [vmem:[%s1] sm:$0xff]
  %v389 = vld [vmem:[%s1 + $0x8] sm:$0xff]
  %v390 = vld [vmem:[%s1 + $0x10] sm:$0xff]
  %v391 = vld [vmem:[%s1 + $0x18] sm:$0xff]
  %v392 = vld [vmem:[%s1 + $0x20] sm:$0xff]
  %v393 = vld [vmem:[%s1 + $0x28] sm:$0xff]
  %v394 = vld [vmem:[%s1 + $0x30] sm:$0xff]
  %v395 = vld [vmem:[%s1 + $0x38] sm:$0xff]
  %v396 = vld [vmem:[%s1 + $0x40] sm:$0xff]
  %v397 = vld [vmem:[%s1 + $0x48] sm:$0xff]
  %v398 = vld [vmem:[%s1 + $0x50] sm:$0xff]
  %v399 = vld [vmem:[%s1 + $0x58] sm:$0xff]
  %v400 = vld [vmem:[%s1 + $0x60] sm:$0xff]
  %v401 = vld [vmem:[%s1 + $0x68] sm:$0xff]
  %v402 = vld [vmem:[%s1 + $0x70] sm:$0xff]
  %v403 = vld [vmem:[%s1 + $0x78] sm:$0xff]
  %v404 = vadd.f32 %v372, %v388
  %v405 = vadd.f32 %v373, %v389
  %v406 = vadd.f32 %v374, %v390
  %v407 = vadd.f32 %v375, %v391
  %v408 = vadd.f32 %v376, %v392
  %v409 = vadd.f32 %v377, %v393
  %v410 = vadd.f32 %v378, %v394
  %v411 = vadd.f32 %v379, %v395
  %v412 = vadd.f32 %v380, %v396
  %v413 = vadd.f32 %v381, %v397
  %v414 = vadd.f32 %v382, %v398
  %v415 = vadd.f32 %v383, %v399
  %v416 = vadd.f32 %v384, %v400
  %v417 = vadd.f32 %v385, %v401
  %v418 = vadd.f32 %v386, %v402
  %v419 = vadd.f32 %v387, %v403
  %vm420 = vcmask 7168
  %v421 = vsel %vm420, %v404, -inf
  %v422 = vsel %vm420, %v405, -inf
  %v423 = vmax.f32 %v421, %v422
  %v424 = vrot.slane %v423, 4
  %v425 = vmax.f32 %v423, %v424
  %v426 = vrot.slane %v425, 2
  %v427 = vmax.f32 %v425, %v426
  %v428 = vrot.slane %v427, 1
  %v429 = vmax.f32 %v427, %v428
  %v430 = vsel %vm420, %v406, -inf
  %v431 = vsel %vm420, %v407, -inf
  %v432 = vmax.f32 %v430, %v431
  %v433 = vrot.slane %v432, 4
  %v434 = vmax.f32 %v432, %v433
  %v435 = vrot.slane %v434, 2
  %v436 = vmax.f32 %v434, %v435
  %v437 = vrot.slane %v436, 1
  %v438 = vmax.f32 %v436, %v437
  %v439 = vsel %vm420, %v408, -inf
  %v440 = vsel %vm420, %v409, -inf
  %v441 = vmax.f32 %v439, %v440
  %v442 = vrot.slane %v441, 4
  %v443 = vmax.f32 %v441, %v442
  %v444 = vrot.slane %v443, 2
  %v445 = vmax.f32 %v443, %v444
  %v446 = vrot.slane %v445, 1
  %v447 = vmax.f32 %v445, %v446
  %v448 = vsel %vm420, %v410, -inf
  %v449 = vsel %vm420, %v411, -inf
  %v450 = vmax.f32 %v448, %v449
  %v451 = vrot.slane %v450, 4
  %v452 = vmax.f32 %v450, %v451
  %v453 = vrot.slane %v452, 2
  %v454 = vmax.f32 %v452, %v453
  %v455 = vrot.slane %v454, 1
  %v456 = vmax.f32 %v454, %v455
  %v457 = vsel %vm420, %v412, -inf
  %v458 = vsel %vm420, %v413, -inf
  %v459 = vmax.f32 %v457, %v458
  %v460 = vrot.slane %v459, 4
  %v461 = vmax.f32 %v459, %v460
  %v462 = vrot.slane %v461, 2
  %v463 = vmax.f32 %v461, %v462
  %v464 = vrot.slane %v463, 1
  %v465 = vmax.f32 %v463, %v464
  %v466 = vsel %vm420, %v414, -inf
  %v467 = vsel %vm420, %v415, -inf
  %v468 = vmax.f32 %v466, %v467
  %v469 = vrot.slane %v468, 4
  %v470 = vmax.f32 %v468, %v469
  %v471 = vrot.slane %v470, 2
  %v472 = vmax.f32 %v470, %v471
  %v473 = vrot.slane %v472, 1
  %v474 = vmax.f32 %v472, %v473
  %v475 = vsel %vm420, %v416, -inf
  %v476 = vsel %vm420, %v417, -inf
  %v477 = vmax.f32 %v475, %v476
  %v478 = vrot.slane %v477, 4
  %v479 = vmax.f32 %v477, %v478
  %v480 = vrot.slane %v479, 2
  %v481 = vmax.f32 %v479, %v480
  %v482 = vrot.slane %v481, 1
  %v483 = vmax.f32 %v481, %v482
  %v484 = vsel %vm420, %v418, -inf
  %v485 = vsel %vm420, %v419, -inf
  %v486 = vmax.f32 %v484, %v485
  %v487 = vrot.slane %v486, 4
  %v488 = vmax.f32 %v486, %v487
  %v489 = vrot.slane %v488, 2
  %v490 = vmax.f32 %v488, %v489
  %v491 = vrot.slane %v490, 1
  %v492 = vmax.f32 %v490, %v491
  %v493 = vsub.f32 %v404, %v429
  %v494 = vsub.f32 %v405, %v429
  %v495 = vsub.f32 %v406, %v438
  %v496 = vsub.f32 %v407, %v438
  %v497 = vsub.f32 %v408, %v447
  %v498 = vsub.f32 %v409, %v447
  %v499 = vsub.f32 %v410, %v456
  %v500 = vsub.f32 %v411, %v456
  %v501 = vsub.f32 %v412, %v465
  %v502 = vsub.f32 %v413, %v465
  %v503 = vsub.f32 %v414, %v474
  %v504 = vsub.f32 %v415, %v474
  %v505 = vsub.f32 %v416, %v483
  %v506 = vsub.f32 %v417, %v483
  %v507 = vsub.f32 %v418, %v492
  %v508 = vsub.f32 %v419, %v492
  %v509 = vmul.f32 %v493, 1.442695
  %v510 = vpow.pop %v509
  %v511 = vmul.f32 %v494, 1.442695
  %v512 = vpow.pop %v511
  %v513 = vmul.f32 %v495, 1.442695
  %v514 = vpow.pop %v513
  %v515 = vmul.f32 %v496, 1.442695
  %v516 = vpow.pop %v515
  %v517 = vmul.f32 %v497, 1.442695
  %v518 = vpow.pop %v517
  %v519 = vmul.f32 %v498, 1.442695
  %v520 = vpow.pop %v519
  %v521 = vmul.f32 %v499, 1.442695
  %v522 = vpow.pop %v521
  %v523 = vmul.f32 %v500, 1.442695
  %v524 = vpow.pop %v523
  %v525 = vmul.f32 %v501, 1.442695
  %v526 = vpow.pop %v525
  %v527 = vmul.f32 %v502, 1.442695
  %v528 = vpow.pop %v527
  %v529 = vmul.f32 %v503, 1.442695
  %v530 = vpow.pop %v529
  %v531 = vmul.f32 %v504, 1.442695
  %v532 = vpow.pop %v531
  %v533 = vmul.f32 %v505, 1.442695
  %v534 = vpow.pop %v533
  %v535 = vmul.f32 %v506, 1.442695
  %v536 = vpow.pop %v535
  %v537 = vmul.f32 %v507, 1.442695
  %v538 = vpow.pop %v537
  %v539 = vmul.f32 %v508, 1.442695
  %v540 = vpow.pop %v539
  %v541 = vsel %vm420, %v510, 0.0
  %v542 = vsel %vm420, %v512, 0.0
  %v543 = vadd.f32 %v541, %v542
  %v544 = vrot.slane %v543, 4
  %v545 = vadd.f32 %v543, %v544
  %v546 = vrot.slane %v545, 2
  %v547 = vadd.f32 %v545, %v546
  %v548 = vrot.slane %v547, 1
  %v549 = vadd.f32 %v547, %v548
  %v550 = vsel %vm420, %v514, 0.0
  %v551 = vsel %vm420, %v516, 0.0
  %v552 = vadd.f32 %v550, %v551
  %v553 = vrot.slane %v552, 4
  %v554 = vadd.f32 %v552, %v553
  %v555 = vrot.slane %v554, 2
  %v556 = vadd.f32 %v554, %v555
  %v557 = vrot.slane %v556, 1
  %v558 = vadd.f32 %v556, %v557
  %v559 = vsel %vm420, %v518, 0.0
  %v560 = vsel %vm420, %v520, 0.0
  %v561 = vadd.f32 %v559, %v560
  %v562 = vrot.slane %v561, 4
  %v563 = vadd.f32 %v561, %v562
  %v564 = vrot.slane %v563, 2
  %v565 = vadd.f32 %v563, %v564
  %v566 = vrot.slane %v565, 1
  %v567 = vadd.f32 %v565, %v566
  %v568 = vsel %vm420, %v522, 0.0
  %v569 = vsel %vm420, %v524, 0.0
  %v570 = vadd.f32 %v568, %v569
  %v571 = vrot.slane %v570, 4
  %v572 = vadd.f32 %v570, %v571
  %v573 = vrot.slane %v572, 2
  %v574 = vadd.f32 %v572, %v573
  %v575 = vrot.slane %v574, 1
  %v576 = vadd.f32 %v574, %v575
  %v577 = vsel %vm420, %v526, 0.0
  %v578 = vsel %vm420, %v528, 0.0
  %v579 = vadd.f32 %v577, %v578
  %v580 = vrot.slane %v579, 4
  %v581 = vadd.f32 %v579, %v580
  %v582 = vrot.slane %v581, 2
  %v583 = vadd.f32 %v581, %v582
  %v584 = vrot.slane %v583, 1
  %v585 = vadd.f32 %v583, %v584
  %v586 = vsel %vm420, %v530, 0.0
  %v587 = vsel %vm420, %v532, 0.0
  %v588 = vadd.f32 %v586, %v587
  %v589 = vrot.slane %v588, 4
  %v590 = vadd.f32 %v588, %v589
  %v591 = vrot.slane %v590, 2
  %v592 = vadd.f32 %v590, %v591
  %v593 = vrot.slane %v592, 1
  %v594 = vadd.f32 %v592, %v593
  %v595 = vsel %vm420, %v534, 0.0
  %v596 = vsel %vm420, %v536, 0.0
  %v597 = vadd.f32 %v595, %v596
  %v598 = vrot.slane %v597, 4
  %v599 = vadd.f32 %v597, %v598
  %v600 = vrot.slane %v599, 2
  %v601 = vadd.f32 %v599, %v600
  %v602 = vrot.slane %v601, 1
  %v603 = vadd.f32 %v601, %v602
  %v604 = vsel %vm420, %v538, 0.0
  %v605 = vsel %vm420, %v540, 0.0
  %v606 = vadd.f32 %v604, %v605
  %v607 = vrot.slane %v606, 4
  %v608 = vadd.f32 %v606, %v607
  %v609 = vrot.slane %v608, 2
  %v610 = vadd.f32 %v608, %v609
  %v611 = vrot.slane %v610, 1
  %v612 = vadd.f32 %v610, %v611
  %v613 = vrcp.pop %v549
  %v614 = vrcp.pop %v558
  %v615 = vrcp.pop %v567
  %v616 = vrcp.pop %v576
  %v617 = vrcp.pop %v585
  %v618 = vrcp.pop %v594
  %v619 = vrcp.pop %v603
  %v620 = vrcp.pop %v612
  %v621 = vmul.f32 %v510, %v613
  %v622 = vmul.f32 %v512, %v613
  %v623 = vmul.f32 %v514, %v614
  %v624 = vmul.f32 %v516, %v614
  %v625 = vmul.f32 %v518, %v615
  %v626 = vmul.f32 %v520, %v615
  %v627 = vmul.f32 %v522, %v616
  %v628 = vmul.f32 %v524, %v616
  %v629 = vmul.f32 %v526, %v617
  %v630 = vmul.f32 %v528, %v617
  %v631 = vmul.f32 %v530, %v618
  %v632 = vmul.f32 %v532, %v618
  %v633 = vmul.f32 %v534, %v619
  %v634 = vmul.f32 %v536, %v619
  %v635 = vmul.f32 %v538, %v620
  %v636 = vmul.f32 %v540, %v620
  %638 = vset.pattern.permute.xlu0 0
  %639 = vperm.xlu0 %638, %v621
  %v640 = vpop.permute.xlu0 %639
  %643 = vset.pattern.permute.xlu0 0
  %644 = vperm.xlu0 %643, %v622
  %v645 = vpop.permute.xlu0 %644
  %648 = vset.pattern.permute.xlu0 0
  %649 = vperm.xlu0 %648, %v623
  %v650 = vpop.permute.xlu0 %649
  %653 = vset.pattern.permute.xlu0 0
  %654 = vperm.xlu0 %653, %v624
  %v655 = vpop.permute.xlu0 %654
  %658 = vset.pattern.permute.xlu0 0
  %659 = vperm.xlu0 %658, %v625
  %v660 = vpop.permute.xlu0 %659
  %663 = vset.pattern.permute.xlu0 0
  %664 = vperm.xlu0 %663, %v626
  %v665 = vpop.permute.xlu0 %664
  %668 = vset.pattern.permute.xlu0 0
  %669 = vperm.xlu0 %668, %v627
  %v670 = vpop.permute.xlu0 %669
  %673 = vset.pattern.permute.xlu0 0
  %674 = vperm.xlu0 %673, %v628
  %v675 = vpop.permute.xlu0 %674
  %678 = vset.pattern.permute.xlu0 0
  %679 = vperm.xlu0 %678, %v629
  %v680 = vpop.permute.xlu0 %679
  %683 = vset.pattern.permute.xlu0 0
  %684 = vperm.xlu0 %683, %v630
  %v685 = vpop.permute.xlu0 %684
  %688 = vset.pattern.permute.xlu0 0
  %689 = vperm.xlu0 %688, %v631
  %v690 = vpop.permute.xlu0 %689
  %693 = vset.pattern.permute.xlu0 0
  %694 = vperm.xlu0 %693, %v632
  %v695 = vpop.permute.xlu0 %694
  %698 = vset.pattern.permute.xlu0 0
  %699 = vperm.xlu0 %698, %v633
  %v700 = vpop.permute.xlu0 %699
  %703 = vset.pattern.permute.xlu0 0
  %704 = vperm.xlu0 %703, %v634
  %v705 = vpop.permute.xlu0 %704
  %708 = vset.pattern.permute.xlu0 0
  %709 = vperm.xlu0 %708, %v635
  %v710 = vpop.permute.xlu0 %709
  %713 = vset.pattern.permute.xlu0 0
  %714 = vperm.xlu0 %713, %v636
  %v715 = vpop.permute.xlu0 %714
  %v717 = vmul.f32 %v640, %v150
  %v718 = vmul.f32 %v645, %v153
  %v719 = vmul.f32 %v650, %v158
  %v720 = vmul.f32 %v655, %v161
  %v721 = vmul.f32 %v660, %v166
  %v722 = vmul.f32 %v665, %v169
  %v723 = vmul.f32 %v670, %v174
  %v724 = vmul.f32 %v675, %v177
  %v725 = vmul.f32 %v680, %v182
  %v726 = vmul.f32 %v685, %v185
  %v727 = vmul.f32 %v690, %v190
  %v728 = vmul.f32 %v695, %v193
  %v729 = vmul.f32 %v700, %v198
  %v730 = vmul.f32 %v705, %v201
  %v731 = vmul.f32 %v710, %v206
  %v732 = vmul.f32 %v715, %v209
  %vm733 = vcmask 785920
  %v734 = vsel %vm733, %v717, 0.0
  %v735 = vsel %vm733, %v718, 0.0
  %v736 = vadd.f32 %v734, %v735
  %v737 = vrot.slane %v736, 4
  %v738 = vadd.f32 %v736, %v737
  %v739 = vrot.slane %v738, 2
  %v740 = vadd.f32 %v738, %v739
  %v741 = vrot.slane %v740, 1
  %v742 = vadd.f32 %v740, %v741
  %v743 = vsel %vm733, %v719, 0.0
  %v744 = vsel %vm733, %v720, 0.0
  %v745 = vadd.f32 %v743, %v744
  %v746 = vrot.slane %v745, 4
  %v747 = vadd.f32 %v745, %v746
  %v748 = vrot.slane %v747, 2
  %v749 = vadd.f32 %v747, %v748
  %v750 = vrot.slane %v749, 1
  %v751 = vadd.f32 %v749, %v750
  %v752 = vsel %vm733, %v721, 0.0
  %v753 = vsel %vm733, %v722, 0.0
  %v754 = vadd.f32 %v752, %v753
  %v755 = vrot.slane %v754, 4
  %v756 = vadd.f32 %v754, %v755
  %v757 = vrot.slane %v756, 2
  %v758 = vadd.f32 %v756, %v757
  %v759 = vrot.slane %v758, 1
  %v760 = vadd.f32 %v758, %v759
  %v761 = vsel %vm733, %v723, 0.0
  %v762 = vsel %vm733, %v724, 0.0
  %v763 = vadd.f32 %v761, %v762
  %v764 = vrot.slane %v763, 4
  %v765 = vadd.f32 %v763, %v764
  %v766 = vrot.slane %v765, 2
  %v767 = vadd.f32 %v765, %v766
  %v768 = vrot.slane %v767, 1
  %v769 = vadd.f32 %v767, %v768
  %v770 = vsel %vm733, %v725, 0.0
  %v771 = vsel %vm733, %v726, 0.0
  %v772 = vadd.f32 %v770, %v771
  %v773 = vrot.slane %v772, 4
  %v774 = vadd.f32 %v772, %v773
  %v775 = vrot.slane %v774, 2
  %v776 = vadd.f32 %v774, %v775
  %v777 = vrot.slane %v776, 1
  %v778 = vadd.f32 %v776, %v777
  %v779 = vsel %vm733, %v727, 0.0
  %v780 = vsel %vm733, %v728, 0.0
  %v781 = vadd.f32 %v779, %v780
  %v782 = vrot.slane %v781, 4
  %v783 = vadd.f32 %v781, %v782
  %v784 = vrot.slane %v783, 2
  %v785 = vadd.f32 %v783, %v784
  %v786 = vrot.slane %v785, 1
  %v787 = vadd.f32 %v785, %v786
  %v788 = vsel %vm733, %v729, 0.0
  %v789 = vsel %vm733, %v730, 0.0
  %v790 = vadd.f32 %v788, %v789
  %v791 = vrot.slane %v790, 4
  %v792 = vadd.f32 %v790, %v791
  %v793 = vrot.slane %v792, 2
  %v794 = vadd.f32 %v792, %v793
  %v795 = vrot.slane %v794, 1
  %v796 = vadd.f32 %v794, %v795
  %v797 = vsel %vm733, %v731, 0.0
  %v798 = vsel %vm733, %v732, 0.0
  %v799 = vadd.f32 %v797, %v798
  %v800 = vrot.slane %v799, 4
  %v801 = vadd.f32 %v799, %v800
  %v802 = vrot.slane %v801, 2
  %v803 = vadd.f32 %v801, %v802
  %v804 = vrot.slane %v803, 1
  %v805 = vadd.f32 %v803, %v804
  %v806 = vld [vmem:[%s3] sm:$0x1]
  %vm815 = vcmask 1041409
  %v816 = vsel %vm815, %v751, %v742
  %vm817 = vcmask 1042434
  %v818 = vsel %vm817, %v760, %v816
  %vm819 = vcmask 1043459
  %v820 = vsel %vm819, %v769, %v818
  %vm821 = vcmask 1044484
  %v822 = vsel %vm821, %v778, %v820
  %vm823 = vcmask 1045509
  %v824 = vsel %vm823, %v787, %v822
  %vm825 = vcmask 1046534
  %v826 = vsel %vm825, %v796, %v824
  %vm827 = vcmask 1047559
  %v828 = vsel %vm827, %v805, %v826
  %829 = vrot.lane.b32.xlu0 %v828, 64
  %v830 = vpop.permute.xlu0 %829
  %v832 = vsel %vm90, %v806, 0
  %v834 = vsel %vm90, %v830, 0
  %836 = vmatprep.subr.mxu0 0.0
  %837 = vmatpush1.xpose.msra.mxu0 %v834
  %838 = vmatprep.subr.mxu0 0.0
  %839 = vmatpush1.xpose.msra.mxu0 0.0
  %840 = vmatprep.subr.mxu0 0.0
  %841 = vmatpush1.xpose.msra.mxu0 0.0
  %842 = vmatprep.subr.mxu0 0.0
  %843 = vmatpush1.xpose.msra.mxu0 0.0
  %844 = vmatprep.subr.mxu0 0.0
  %845 = vmatpush1.xpose.msra.mxu0 0.0
  %846 = vmatprep.subr.mxu0 0.0
  %847 = vmatpush1.xpose.msra.mxu0 0.0
  %848 = vmatprep.subr.mxu0 0.0
  %849 = vmatpush1.xpose.msra.mxu0 0.0
  %850 = vmatprep.subr.mxu0 0.0
  %851 = vmatpush1.xpose.msra.mxu0 0.0
  %852 = vmatprep.subr.mxu0 0.0
  %853 = vmatpush1.xpose.msra.mxu0 0.0
  %854 = vmatprep.subr.mxu0 0.0
  %855 = vmatpush1.xpose.msra.mxu0 0.0
  %856 = vmatprep.subr.mxu0 0.0
  %857 = vmatpush1.xpose.msra.mxu0 0.0
  %858 = vmatprep.subr.mxu0 0.0
  %859 = vmatpush1.xpose.msra.mxu0 0.0
  %860 = vmatprep.subr.mxu0 0.0
  %861 = vmatpush1.xpose.msra.mxu0 0.0
  %862 = vmatprep.subr.mxu0 0.0
  %863 = vmatpush1.xpose.msra.mxu0 0.0
  %864 = vmatprep.subr.mxu0 0.0
  %865 = vmatpush1.xpose.msra.mxu0 0.0
  %866 = vmatprep.subr.mxu0 0.0
  %867 = vmatpush1.xpose.msra.mxu0 0.0
  %868 = vmatprep.subr.mxu0 0.0
  %869 = vmatpush1.xpose.msra.mxu0 0.0
  %870 = vmatprep.subr.mxu0 0.0
  %871 = vmatpush1.xpose.msra.mxu0 0.0
  %872 = vmatprep.subr.mxu0 0.0
  %873 = vmatpush1.xpose.msra.mxu0 0.0
  %874 = vmatprep.subr.mxu0 0.0
  %875 = vmatpush1.xpose.msra.mxu0 0.0
  %876 = vmatprep.subr.mxu0 0.0
  %877 = vmatpush1.xpose.msra.mxu0 0.0
  %878 = vmatprep.subr.mxu0 0.0
  %879 = vmatpush1.xpose.msra.mxu0 0.0
  %880 = vmatprep.subr.mxu0 0.0
  %881 = vmatpush1.xpose.msra.mxu0 0.0
  %882 = vmatprep.subr.mxu0 0.0
  %883 = vmatpush1.xpose.msra.mxu0 0.0
  %884 = vmatprep.subr.mxu0 0.0
  %885 = vmatpush1.xpose.msra.mxu0 0.0
  %886 = vmatprep.subr.mxu0 0.0
  %887 = vmatpush1.xpose.msra.mxu0 0.0
  %888 = vmatprep.subr.mxu0 0.0
  %889 = vmatpush1.xpose.msra.mxu0 0.0
  %890 = vmatprep.subr.mxu0 0.0
  %891 = vmatpush1.xpose.msra.mxu0 0.0
  %892 = vmatprep.subr.mxu0 0.0
  %893 = vmatpush1.xpose.msra.mxu0 0.0
  %894 = vmatprep.subr.mxu0 0.0
  %895 = vmatpush1.xpose.msra.mxu0 0.0
  %896 = vmatprep.subr.mxu0 0.0
  %897 = vmatpush1.xpose.msra.mxu0 0.0
  %898 = vmatprep.subr.mxu0 0.0
  %899 = vmatpush1.xpose.msra.mxu0 0.0
  %900 = vmatprep.mubr.f32.mxu0 0.0
  %901 = vmatmul.mubr.f32.gmra.mrb[0].mxu0 %v832
  %v902 = vpop.f32.mrb[0].mxu0
  %v903 = vadd.f32 0.0, %v902
  %v904 = vpop.f32.mrb[0].mxu0
  %905 = vdwg.mxu0
  %vm906 = vcmask 57344
  %907 = vst.msk [vmem:[%s4] sm:$0x1] %vm906, %v903
  // Predicated region
  $region18: #{baseline_logits.1} parent=0 // pred_check
    _
  $region19: #{baseline_logits.1} parent=0 // pred_check_branch
    %909 = sbr.rel (0) target = $region21
  $region20: #{baseline_logits.1} parent=0 // pred_region
    _
  $region21: #{baseline_logits.1} parent=0 // pred_fallthru
    _
  // Predicated region
  $region22: #{baseline_logits.1} parent=0 // pred_check
    _
  $region23: #{baseline_logits.1} parent=0 // pred_check_branch
    %911 = sbr.rel (0) target = $region25
  $region24: #{baseline_logits.1} parent=0 // pred_region
    _
  $region25: #{baseline_logits.1} parent=0 // pred_fallthru
    _

</llo_original>
